<compile_context>
chip_gen: v7x
topology: tpu7x:2x2x1
jax: 0.10.0
libtpu: 0.0.40
codegen_flags: <defaults>
</compile_context>

<pallas_src>
import jax
import jax.numpy as jnp
from jax.experimental import pallas as pl
from jax.experimental.pallas import tpu as pltpu


def _wsum_kernel(q_ref, x1_ref, x2_ref, o_ref):
    # 3-D path: all refs are (1, TR, L)        -> pure elementwise.
    # 2-D path: q_ref is (1, TF), x*: (TN, TF) -> sublane broadcast of Q.
    q = q_ref[...]
    x1 = x1_ref[...]
    x2 = x2_ref[...]
    # out = x1*Q + (1-Q)*x2  ==  x2 + Q*(x1 - x2)
    o_ref[...] = (x2 + q * (x1 - x2)).astype(o_ref.dtype)


def _sublane_min(dtype):
    """Min second-to-last tile: 8 rows/vreg f32, 16 bf16, 32 int8/fp8."""
    return max(8, 32 // jnp.dtype(dtype).itemsize)


def _round_down(v, m):
    return (v // m) * m


def _vmem_budgets():
    """Generation-aware budgets (v7x has 64 MiB VMEM; v5e/v6e have 128 MiB)."""
    try:
        cap = int(pltpu.get_tpu_info().vmem_capacity_bytes)
        if cap <= 0:
            raise ValueError("bad vmem capacity")
    except Exception:
        cap = 64 << 20  # conservative fallback = v7x per-TC VMEM
    stream_budget = cap // 2      # double-buffered streamed slabs per step
    vmem_limit = (cap * 3) // 4   # scoped-VMEM limit with headroom
    return stream_budget, vmem_limit


def _pick_3d_row_tile(r, lane, itemsize, smin, stream_budget, total_bytes):
    """Rows of the R axis per grid step for the (N, R, 128) layout."""
    # Per step, double-buffered: x1 + x2 + out blocks (1,TR,L) plus Q (1,TR,L).
    per_row = 2 * 4 * lane * itemsize
    max_rows = max(1, stream_budget // per_row)
    if max_rows >= r or r <= smin:
        tr = r                                       # full extent (always legal)
    else:
        tr = max(smin, _round_down(min(max_rows, r), smin))
    # v7x megacore: keep >= 2 (ideally 4) blocks on the leading (parallel)
    # grid axis when the problem is big enough that an idle 2nd TC matters.
    if total_bytes > (4 << 20):
        if r >= 4 * smin:
            target = 4
        elif r >= 2 * smin:
            target = 2
        else:
            target = 1
        if target > 1:
            cap = max(smin, _round_down(pl.cdiv(r, target), smin))
            tr = min(tr, cap)
    return tr


def _pick_2d_tiles(n, f, itemsize, smin, stream_budget, total_bytes):
    """(rows, lanes) per grid step for the flattened (N, F) fallback layout."""
    if f <= 128:
        tf = f                                       # full extent (always legal)
    else:
        # Bounded multiple of 128; ragged tail handled by pl.cdiv edge blocks.
        tf = min(_round_down(f, 128), 8192)
        if total_bytes > (4 << 20) and f >= 256:
            tf = min(tf, max(128, _round_down(pl.cdiv(f, 2), 128)))
    per_row = 2 * 3 * tf * itemsize                  # x1/x2/out, double-buffered
    q_bytes = 2 * tf * itemsize                      # Q slab, double-buffered
    max_rows = max(1, (stream_budget - q_bytes) // per_row)
    if max_rows >= n or n <= smin:
        tn = n
    else:
        tn = max(smin, _round_down(min(max_rows, n), smin))
    return tn, tf


def w_summation(x1, x2, q):
    """x1 * Q + (1 - Q) * x2 with x1, x2: (N, C, H, W), Q: (C, H, W)."""
    N, C, H, W = x1.shape
    assert x2.shape == (N, C, H, W)
    assert q.shape == (C, H, W)

    F = C * H * W
    itemsize = jnp.dtype(x1.dtype).itemsize
    smin = _sublane_min(x1.dtype)
    stream_budget, vmem_limit = _vmem_budgets()
    total_bytes = 3 * N * F * itemsize               # x1 + x2 + out HBM traffic

    compiler_params = pltpu.CompilerParams(
        dimension_semantics=("parallel", "parallel"),
        vmem_limit_bytes=vmem_limit,
    )

    lane = 128
    # 3-D layout wins whenever its sublane density (R rows) is at least what
    # the flattened layout could get from the batch axis.
    use_3d = (F % lane == 0) and (F // lane) >= min(N, smin)

    if use_3d:
        R = F // lane
        x1r = x1.reshape(N, R, lane)
        x2r = x2.reshape(N, R, lane)
        q3 = q.reshape(1, R, lane)
        tr = _pick_3d_row_tile(R, lane, itemsize, smin, stream_budget, total_bytes)
        grid = (pl.cdiv(R, tr), N)        # batch innermost: Q block constant there
        out = pl.pallas_call(
            _wsum_kernel,
            out_shape=jax.ShapeDtypeStruct((N, R, lane), x1.dtype),
            grid_spec=pltpu.PrefetchScalarGridSpec(
                num_scalar_prefetch=0,
                grid=grid,
                in_specs=[
                    pl.BlockSpec((1, tr, lane), lambda r, n: (0, r, 0)),  # Q
                    pl.BlockSpec((1, tr, lane), lambda r, n: (n, r, 0)),  # x1
                    pl.BlockSpec((1, tr, lane), lambda r, n: (n, r, 0)),  # x2
                ],
                out_specs=pl.BlockSpec((1, tr, lane), lambda r, n: (n, r, 0)),
            ),
            compiler_params=compiler_params,
        )(q3, x1r, x2r)
        return out.reshape(N, C, H, W)

    # Fallback: flattened lane-dense (N, F) layout with ragged edge blocks.
    x1f = x1.reshape(N, F)
    x2f = x2.reshape(N, F)
    qf = q.reshape(1, F)
    tn, tf = _pick_2d_tiles(N, F, itemsize, smin, stream_budget, total_bytes)
    grid = (pl.cdiv(F, tf), pl.cdiv(N, tn))          # batch innermost
    out = pl.pallas_call(
        _wsum_kernel,
        out_shape=jax.ShapeDtypeStruct((N, F), x1.dtype),
        grid_spec=pltpu.PrefetchScalarGridSpec(
            num_scalar_prefetch=0,
            grid=grid,
            in_specs=[
                pl.BlockSpec((1, tf), lambda j, i: (0, j)),   # Q (constant over i)
                pl.BlockSpec((tn, tf), lambda j, i: (i, j)),  # x1
                pl.BlockSpec((tn, tf), lambda j, i: (i, j)),  # x2
            ],
            out_specs=pl.BlockSpec((tn, tf), lambda j, i: (i, j)),
        ),
        compiler_params=compiler_params,
    )(qf, x1f, x2f)
    return out.reshape(N, C, H, W)


if __name__ == "__main__":
    # Small shapes consistent with the module: input_dim = [C, H, W]
    N, C, H, W = 2, 4, 16, 16

    key = jax.random.PRNGKey(0)
    k_q, k_x1, k_x2 = jax.random.split(key, 3)

    # Q ~ U[0,1) like torch.rand(input_dim); deterministic in-script init.
    q = jax.random.uniform(k_q, (C, H, W), dtype=jnp.float32)
    x1 = jax.random.normal(k_x1, (N, C, H, W), dtype=jnp.float32)
    x2 = jax.random.normal(k_x2, (N, C, H, W), dtype=jnp.float32)

    out = jax.block_until_ready(w_summation(x1, x2, q))

    # Reference check against plain JAX broadcasting semantics.
    ref = x1 * q + (1.0 - q) * x2
    assert out.shape == (N, C, H, W)
    # Kernel uses the fused form x2 + q*(x1-x2); not bit-identical, so allow
    # a small fp32 tolerance.
    assert jnp.allclose(out, ref, atol=1e-5, rtol=1e-5)

    print("KERNEL_OK")
</pallas_src>

<mosaic_0001>
module attributes {stable_mosaic.version = 11 : i64} {
  func.func @_wsum_kernel(%arg0: i32, %arg1: i32, %arg2: memref<1x8x128xf32, #tpu.memory_space<vmem>>, %arg3: memref<1x8x128xf32, #tpu.memory_space<vmem>>, %arg4: memref<1x8x128xf32, #tpu.memory_space<vmem>>, %arg5: memref<1x8x128xf32, #tpu.memory_space<vmem>>) attributes {dimension_semantics = [#tpu.dimension_semantics<parallel>, #tpu.dimension_semantics<parallel>], iteration_bounds = array<i64: 1, 2>, scalar_prefetch = 0 : i64, scratch_operands = 0 : i64, tpu.core_type = #tpu.core_type<tc>, window_params = [{transform_indices = @transform_0, window_bounds = array<i64: 1, 8, 128>}, {transform_indices = @transform_1, window_bounds = array<i64: 1, 8, 128>}, {transform_indices = @transform_2, window_bounds = array<i64: 1, 8, 128>}, {transform_indices = @transform_3, window_bounds = array<i64: 1, 8, 128>}]} {
    %c0 = arith.constant 0 : index
    %c0_0 = arith.constant 0 : index
    %c0_1 = arith.constant 0 : index
    %0 = vector.load %arg2[%c0, %c0_0, %c0_1] : memref<1x8x128xf32, #tpu.memory_space<vmem>>, vector<1x8x128xf32>
    %c0_2 = arith.constant 0 : index
    %c0_3 = arith.constant 0 : index
    %c0_4 = arith.constant 0 : index
    %1 = vector.load %arg3[%c0_2, %c0_3, %c0_4] : memref<1x8x128xf32, #tpu.memory_space<vmem>>, vector<1x8x128xf32>
    %c0_5 = arith.constant 0 : index
    %c0_6 = arith.constant 0 : index
    %c0_7 = arith.constant 0 : index
    %2 = vector.load %arg4[%c0_5, %c0_6, %c0_7] : memref<1x8x128xf32, #tpu.memory_space<vmem>>, vector<1x8x128xf32>
    %3 = arith.subf %1, %2 : vector<1x8x128xf32>
    %4 = arith.mulf %0, %3 : vector<1x8x128xf32>
    %5 = arith.addf %2, %4 : vector<1x8x128xf32>
    %c0_8 = arith.constant 0 : index
    %c0_9 = arith.constant 0 : index
    %c0_10 = arith.constant 0 : index
    %6 = vector.load %arg5[%c0_8, %c0_9, %c0_10] : memref<1x8x128xf32, #tpu.memory_space<vmem>>, vector<1x8x128xf32>
    tpu.vector_store %arg5[%c0_8, %c0_9, %c0_10], %5 {strides = array<i32>} : memref<1x8x128xf32, #tpu.memory_space<vmem>>, vector<1x8x128xf32>,
    return
  }
  func.func @transform_0(%arg0: i32, %arg1: i32) -> (i32, i32, i32) {
    %c0_i32 = arith.constant 0 : i32
    %c0_i32_0 = arith.constant 0 : i32
    %c0_i32_1 = arith.constant 0 : i32
    return %c0_i32, %arg0, %c0_i32_0 : i32, i32, i32
  }
  func.func @transform_1(%arg0: i32, %arg1: i32) -> (i32, i32, i32) {
    %c0_i32 = arith.constant 0 : i32
    %c0_i32_0 = arith.constant 0 : i32
    return %arg1, %arg0, %c0_i32 : i32, i32, i32
  }
  func.func @transform_2(%arg0: i32, %arg1: i32) -> (i32, i32, i32) {
    %c0_i32 = arith.constant 0 : i32
    %c0_i32_0 = arith.constant 0 : i32
    return %arg1, %arg0, %c0_i32 : i32, i32, i32
  }
  func.func @transform_3(%arg0: i32, %arg1: i32) -> (i32, i32, i32) {
    %c0_i32 = arith.constant 0 : i32
    %c0_i32_0 = arith.constant 0 : i32
    return %arg1, %arg0, %c0_i32 : i32, i32, i32
  }
}

</mosaic_0001>

<llo_original>
// kernel: tpu_custom_call.1
$region0: #{tpu_custom_call.1}
  #allocation0 [shape = 'u32[]', space=smem, size = 0x4, offset = 0x4, fixed_abs, tag = 'smem constant byte address 0x4 - core index']
  #allocation1 [shape = 'u32[144,128]{1,0:T(1,128)}', space=vmem, size = 0x12000, scoped, tag = 'internal scratch']
  %s0 = inlined_call_operand.hbm [shape: f32[1,8,128], index: 0, kind: input, shape index: {}]
  %s1 = inlined_call_operand.hbm [shape: f32[2,8,128], index: 1, kind: input, shape index: {}]
  %s2 = inlined_call_operand.hbm [shape: f32[2,8,128], index: 2, kind: input, shape index: {}]
  %s3 = inlined_call_operand.hbm [shape: f32[2,8,128], index: 3, kind: output, shape index: {}]
  %s4 = sld [smem:[#allocation0]]
  $region57: #{tpu_custom_call.1} parent=0
    _
  %s6 = ssub.s32 1, %s4
  %s7 = scalar_select 0, %s6, %s4
  $region1: #{tpu_custom_call.1} parent=0
    #allocation2 [shape = 'u8[4096]{0}', space=vmem, size = 0x1000, scoped, tag = 'input window, operand 0, single buffered']
    #allocation3 [shape = 's32[2]{0}', space=sflag, size = 0x8, scoped, tag = 'scoped memory for tpu_custom_call.1']
    #allocation4 [shape = 's32[2]{0}', space=sflag, size = 0x8, scoped, tag = 'scoped memory for tpu_custom_call.1']
    #allocation5 [shape = 'u8[8192]{0}', space=vmem, size = 0x2000, scoped, tag = 'input window, operand 1']
    #allocation6 [shape = 's32[2]{0}', space=sflag, size = 0x8, scoped, tag = 'scoped memory for tpu_custom_call.1']
    #allocation7 [shape = 'u8[8192]{0}', space=vmem, size = 0x2000, scoped, tag = 'input window, operand 2']
    #allocation8 [shape = 'u8[8192]{0}', space=vmem, size = 0x2000, scoped, tag = 'output window, operand 0']
    %8 = vsyncpa [#allocation3], 0
    %9 = vsyncpa [#allocation6], 0
    %s10 = scalar_lea.sflag [#allocation6], 1
    %11 = vsyncpa %s10, 0
    %12 = vsyncpa [#allocation4], 0
    %s13 = scalar_lea.sflag [#allocation4], 1
    %14 = vsyncpa %s13, 0
    loop: start=0, step=1, limit=4
    $region2: #{tpu_custom_call.1} parent=1 // loop_pre_header
      _
    $region3: #{tpu_custom_call.1} parent=1 // loop_header
      %s16 = sphi 0, %s20
      %p17 = scmp.ge.s32.totalorder %s16, 4
      %s23 = sphi 0, %s35
      %s24 = sphi 0, %s31
      %s25 = sphi 0, %s23
      %s26 = sphi 0, %s24
      %s27 = sphi 0, %s25
      %s28 = sphi 0, %s26
      %s38 = sphi 0, %s40
      %s41 = sphi 0, %s38
      %s42 = sphi 0, %s41
      %s58 = sphi 0, %s42
      %s66 = sphi 0, %s68
      %s69 = sphi 0, %s66
      %s70 = sphi 0, %s69
      %s86 = sphi 0, %s70
      %s94 = sphi 0, %s96
      %s97 = sphi 0, %s94
      %s98 = sphi 0, %s97
      %s114 = sphi 0, %s98
      %s122 = sphi 0, %s124
      %s125 = sphi 0, %s122
      %s126 = sphi 0, %s125
      %s142 = sphi 0, %s126
    $region4: #{tpu_custom_call.1} parent=1 // loop_header_branch
      %19 = sbr.rel (%p17) target = $region8
    $region5: #{tpu_custom_call.1} parent=1 // loop_body
      %s21 = ssub.s32 %s16, 1
      %s22 = ssub.s32 %s16, 2
      %s29 = sadd.s32 1, %s24
      %p30 = scmp.ge.s32.totalorder %s29, 2
      %s31 = scalar_select %p30, 0, %s29
      %s32 = sadd.s32 1, %s23
      %s33 = scalar_select %p30, %s32, %s23
      %p34 = scmp.ge.s32.totalorder %s33, 1
      %s35 = scalar_select %p34, 0, %s33
      %s36 = ssub.s32 %s23, %s35
      %p37 = scmp.eq.s32.totalorder %s36, 0
      %s39 = sadd.s32 %s38, 1
      %s40 = scalar_select %p37, %s38, %s39
      %p43 = pneg %p37
      %p44 = scmp.eq.s32.totalorder %s16, 1
      %p45 = por %p43, %p44
      %p46 = scmp.ne.s32.totalorder %s38, %s41
      %p47 = scmp.eq.s32.totalorder %s16, 0
      %p48 = por %p46, %p47
      %p49 = scmp.ne.s32.totalorder %s38, %s41
      %p50 = scmp.eq.s32.totalorder %s21, 1
      %p51 = por %p49, %p50
      %p52 = scmp.ne.s32.totalorder %s41, %s42
      %p53 = scmp.eq.s32.totalorder %s21, 0
      %p54 = por %p52, %p53
      %p55 = scmp.ne.s32.totalorder %s41, %s42
      %p56 = scmp.eq.s32.totalorder %s22, 1
      %p57 = por %p55, %p56
      %p59 = scmp.ne.s32.totalorder %s42, %s58
      %p60 = scmp.eq.s32.totalorder %s22, 0
      %p61 = por %p59, %p60
      %s62 = ssub.s32 %s24, %s31
      %s63 = ssub.s32 %s23, %s35
      %s64 = sor.u32 %s62, %s63
      %p65 = scmp.eq.s32.totalorder %s64, 0
      %s67 = sadd.s32 %s66, 1
      %s68 = scalar_select %p65, %s66, %s67
      %p71 = pneg %p65
      %p72 = scmp.eq.s32.totalorder %s16, 1
      %p73 = por %p71, %p72
      %p74 = scmp.ne.s32.totalorder %s66, %s69
      %p75 = scmp.eq.s32.totalorder %s16, 0
      %p76 = por %p74, %p75
      %p77 = scmp.ne.s32.totalorder %s66, %s69
      %p78 = scmp.eq.s32.totalorder %s21, 1
      %p79 = por %p77, %p78
      %p80 = scmp.ne.s32.totalorder %s69, %s70
      %p81 = scmp.eq.s32.totalorder %s21, 0
      %p82 = por %p80, %p81
      %p83 = scmp.ne.s32.totalorder %s69, %s70
      %p84 = scmp.eq.s32.totalorder %s22, 1
      %p85 = por %p83, %p84
      %p87 = scmp.ne.s32.totalorder %s70, %s86
      %p88 = scmp.eq.s32.totalorder %s22, 0
      %p89 = por %p87, %p88
      %s90 = ssub.s32 %s24, %s31
      %s91 = ssub.s32 %s23, %s35
      %s92 = sor.u32 %s90, %s91
      %p93 = scmp.eq.s32.totalorder %s92, 0
      %s95 = sadd.s32 %s94, 1
      %s96 = scalar_select %p93, %s94, %s95
      %p99 = pneg %p93
      %p100 = scmp.eq.s32.totalorder %s16, 1
      %p101 = por %p99, %p100
      %p102 = scmp.ne.s32.totalorder %s94, %s97
      %p103 = scmp.eq.s32.totalorder %s16, 0
      %p104 = por %p102, %p103
      %p105 = scmp.ne.s32.totalorder %s94, %s97
      %p106 = scmp.eq.s32.totalorder %s21, 1
      %p107 = por %p105, %p106
      %p108 = scmp.ne.s32.totalorder %s97, %s98
      %p109 = scmp.eq.s32.totalorder %s21, 0
      %p110 = por %p108, %p109
      %p111 = scmp.ne.s32.totalorder %s97, %s98
      %p112 = scmp.eq.s32.totalorder %s22, 1
      %p113 = por %p111, %p112
      %p115 = scmp.ne.s32.totalorder %s98, %s114
      %p116 = scmp.eq.s32.totalorder %s22, 0
      %p117 = por %p115, %p116
      %s118 = ssub.s32 %s24, %s31
      %s119 = ssub.s32 %s23, %s35
      %s120 = sor.u32 %s118, %s119
      %p121 = scmp.eq.s32.totalorder %s120, 0
      %s123 = sadd.s32 %s122, 1
      %s124 = scalar_select %p121, %s122, %s123
      %p127 = pneg %p121
      %p128 = scmp.eq.s32.totalorder %s16, 1
      %p129 = por %p127, %p128
      %p130 = scmp.ne.s32.totalorder %s122, %s125
      %p131 = scmp.eq.s32.totalorder %s16, 0
      %p132 = por %p130, %p131
      %p133 = scmp.ne.s32.totalorder %s122, %s125
      %p134 = scmp.eq.s32.totalorder %s21, 1
      %p135 = por %p133, %p134
      %p136 = scmp.ne.s32.totalorder %s125, %s126
      %p137 = scmp.eq.s32.totalorder %s21, 0
      %p138 = por %p136, %p137
      %p139 = scmp.ne.s32.totalorder %s125, %s126
      %p140 = scmp.eq.s32.totalorder %s22, 1
      %p141 = por %p139, %p140
      %p143 = scmp.ne.s32.totalorder %s126, %s142
      %p144 = scmp.eq.s32.totalorder %s22, 0
      %p145 = por %p143, %p144
      %p146 = scmp.le.s32.totalorder 1, %s16
      %p147 = scmp.lt.s32.totalorder %s16, 3
      %p148 = pnand %p146, %p147
      %p149 = pneg %p148
      // Predicated region
      $region9: #{tpu_custom_call.1} parent=5 // pred_check
        _
      $region10: #{tpu_custom_call.1} parent=5 // pred_check_branch
        %151 = sbr.rel (%p148) target = $region12
      $region11: #{tpu_custom_call.1} parent=5 // pred_region
        %s152 = ssub.s32 %s16, 1
        // Predicated region
        $region13: #{tpu_custom_call.1} parent=11 // pred_check
          %p153 = pneg %p54
        $region14: #{tpu_custom_call.1} parent=11 // pred_check_branch
          %155 = sbr.rel (%p153) target = $region16
        $region15: #{tpu_custom_call.1} parent=11 // pred_region
          %s157 = ssub.s32 128, 128
          %158 = vsyncadd [#allocation3], %s157
          %s159 = smul.addr %s25, 128
          %s160 = scalar_lea.hbm %s0, %s159
          %s162 = sshll.u32 [#allocation2], 4
          %s163 = int_to_ptr.vmem [resolvable:$true] %s162
          %165 = dma.hbm_to_vmem [thread:$0]  %s160, 128, %s163, [#allocation3]
        $region16: #{tpu_custom_call.1} parent=11 // pred_fallthru
          _
      $region12: #{tpu_custom_call.1} parent=5 // pred_fallthru
        _
      %p166 = scmp.lt.s32.totalorder %s16, 2
      // Predicated region
      $region17: #{tpu_custom_call.1} parent=5 // pred_check
        %p167 = pneg %p166
      $region18: #{tpu_custom_call.1} parent=5 // pred_check_branch
        %169 = sbr.rel (%p167) target = $region20
      $region19: #{tpu_custom_call.1} parent=5 // pred_region
        // Predicated region
        $region21: #{tpu_custom_call.1} parent=19 // pred_check
          %p170 = pneg %p76
        $region22: #{tpu_custom_call.1} parent=19 // pred_check_branch
          %172 = sbr.rel (%p170) target = $region24
        $region23: #{tpu_custom_call.1} parent=19 // pred_region
          %s173 = sand.u32 %s16, 1
          %s174 = scalar_lea.sflag [#allocation6], %s173
          %s175 = sand.u32 %s66, 1
          %s176 = smul.addr %s175, 8
          %s177 = scalar_lea.vmem [#allocation5], %s176
          %s179 = ssub.s32 128, 128
          %180 = vsyncadd %s174, %s179
          %s181 = sadd.s32 %s23, %s24
          %s182 = smul.addr %s181, 128
          %s183 = scalar_lea.hbm %s1, %s182
          %s185 = sshll.u32 %s177, 4
          %s186 = int_to_ptr.vmem [resolvable:$true] %s185
          %188 = dma.hbm_to_vmem [thread:$0]  %s183, 128, %s186, %s174
        $region24: #{tpu_custom_call.1} parent=19 // pred_fallthru
          _
        // Predicated region
        $region25: #{tpu_custom_call.1} parent=19 // pred_check
          %p189 = pneg %p104
        $region26: #{tpu_custom_call.1} parent=19 // pred_check_branch
          %191 = sbr.rel (%p189) target = $region28
        $region27: #{tpu_custom_call.1} parent=19 // pred_region
          %s192 = sand.u32 %s16, 1
          %s193 = scalar_lea.sflag [#allocation6], %s192
          %s194 = sand.u32 %s94, 1
          %s195 = smul.addr %s194, 8
          %s196 = scalar_lea.vmem [#allocation7], %s195
          %s198 = ssub.s32 128, 128
          %199 = vsyncadd %s193, %s198
          %s200 = sadd.s32 %s23, %s24
          %s201 = smul.addr %s200, 128
          %s202 = scalar_lea.hbm %s2, %s201
          %s204 = sshll.u32 %s196, 4
          %s205 = int_to_ptr.vmem [resolvable:$true] %s204
          %207 = dma.hbm_to_vmem [thread:$0]  %s202, 128, %s205, %s193
        $region28: #{tpu_custom_call.1} parent=19 // pred_fallthru
          _
      $region20: #{tpu_custom_call.1} parent=5 // pred_fallthru
        _
      %p208 = scmp.le.s32.totalorder 1, %s16
      %p209 = scmp.lt.s32.totalorder %s16, 3
      %p210 = pnand %p208, %p209
      %p211 = pneg %p210
      // Predicated region
      $region29: #{tpu_custom_call.1} parent=5 // pred_check
        _
      $region30: #{tpu_custom_call.1} parent=5 // pred_check_branch
        %213 = sbr.rel (%p210) target = $region32
      $region31: #{tpu_custom_call.1} parent=5 // pred_region
        %s214 = ssub.s32 %s16, 1
        // Predicated region
        $region33: #{tpu_custom_call.1} parent=31 // pred_check
          %p215 = pneg %p54
        $region34: #{tpu_custom_call.1} parent=31 // pred_check_branch
          %217 = sbr.rel (%p215) target = $region36
        $region35: #{tpu_custom_call.1} parent=31 // pred_region
          %218 = dma.done [#allocation3], 128
        $region36: #{tpu_custom_call.1} parent=31 // pred_fallthru
          _
        %s219 = sand.u32 %s21, 1
        %s220 = scalar_lea.sflag [#allocation6], %s219
        %s221 = sand.u32 %s69, 1
        %s222 = smul.addr %s221, 8
        %s223 = scalar_lea.vmem [#allocation5], %s222
        // Predicated region
        $region37: #{tpu_custom_call.1} parent=31 // pred_check
          %p224 = pneg %p82
        $region38: #{tpu_custom_call.1} parent=31 // pred_check_branch
          %226 = sbr.rel (%p224) target = $region40
        $region39: #{tpu_custom_call.1} parent=31 // pred_region
          %227 = dma.done %s220, 128
        $region40: #{tpu_custom_call.1} parent=31 // pred_fallthru
          _
        %s228 = sand.u32 %s21, 1
        %s229 = scalar_lea.sflag [#allocation6], %s228
        %s230 = sand.u32 %s97, 1
        %s231 = smul.addr %s230, 8
        %s232 = scalar_lea.vmem [#allocation7], %s231
        // Predicated region
        $region41: #{tpu_custom_call.1} parent=31 // pred_check
          %p233 = pneg %p110
        $region42: #{tpu_custom_call.1} parent=31 // pred_check_branch
          %235 = sbr.rel (%p233) target = $region44
        $region43: #{tpu_custom_call.1} parent=31 // pred_region
          %236 = dma.done %s229, 128
        $region44: #{tpu_custom_call.1} parent=31 // pred_fallthru
          _
        %p237 = pneg %p54
        %p238 = pneg %p51
        %s239 = sand.u32 %s21, 1
        %s240 = scalar_lea.sflag [#allocation6], %s239
        %s241 = sand.u32 %s69, 1
        %s242 = smul.addr %s241, 8
        %s243 = scalar_lea.vmem [#allocation5], %s242
        %p244 = pneg %p82
        %p245 = pneg %p79
        %s246 = sand.u32 %s21, 1
        %s247 = scalar_lea.sflag [#allocation6], %s246
        %s248 = sand.u32 %s97, 1
        %s249 = smul.addr %s248, 8
        %s250 = scalar_lea.vmem [#allocation7], %s249
        %p251 = pneg %p110
        %p252 = pneg %p107
        %p253 = pneg %p138
        %p254 = pneg %p135
        %s255 = sand.u32 %s125, 1
        %s256 = scalar_lea.sflag [#allocation4], %s255
        %s257 = sand.u32 %s125, 1
        %s258 = smul.addr %s257, 8
        %s259 = scalar_lea.vmem [#allocation8], %s258
        %v260 = vld [vmem:[#allocation2] sm:$0xff]
        %v261 = vld [vmem:[%s223] sm:$0xff]
        %v262 = vld [vmem:[%s232] sm:$0xff]
        %v263 = vsub.f32 %v261, %v262
        %v264 = vmul.f32 %v260, %v263
        %v265 = vadd.f32 %v262, %v264
        %266 = vst [vmem:[%s259] sm:$0xff] %v265
        %s267 = sand.u32 %s125, 1
        %s268 = scalar_lea.sflag [#allocation4], %s267
        %s269 = sand.u32 %s125, 1
        %s270 = smul.addr %s269, 8
        %s271 = scalar_lea.vmem [#allocation8], %s270
        // Predicated region
        $region45: #{tpu_custom_call.1} parent=31 // pred_check
          %p272 = pneg %p135
        $region46: #{tpu_custom_call.1} parent=31 // pred_check_branch
          %274 = sbr.rel (%p272) target = $region48
        $region47: #{tpu_custom_call.1} parent=31 // pred_region
          %s276 = ssub.s32 128, 128
          %277 = vsyncadd %s268, %s276
          %s278 = sadd.s32 %s25, %s26
          %s279 = smul.addr %s278, 128
          %s280 = scalar_lea.hbm %s3, %s279
          %s282 = sshll.u32 %s271, 4
          %s283 = int_to_ptr.vmem [resolvable:$true] %s282
          %285 = dma.vmem_to_hbm [thread:$0]  %s283, 128, %s280, %s268
        $region48: #{tpu_custom_call.1} parent=31 // pred_fallthru
          _
      $region32: #{tpu_custom_call.1} parent=5 // pred_fallthru
        _
      %p286 = scmp.le.s32.totalorder 2, %s16
      // Predicated region
      $region49: #{tpu_custom_call.1} parent=5 // pred_check
        %p287 = pneg %p286
      $region50: #{tpu_custom_call.1} parent=5 // pred_check_branch
        %289 = sbr.rel (%p287) target = $region52
      $region51: #{tpu_custom_call.1} parent=5 // pred_region
        %s290 = ssub.s32 %s16, 2
        // Predicated region
        $region53: #{tpu_custom_call.1} parent=51 // pred_check
          %p291 = pneg %p141
        $region54: #{tpu_custom_call.1} parent=51 // pred_check_branch
          %293 = sbr.rel (%p291) target = $region56
        $region55: #{tpu_custom_call.1} parent=51 // pred_region
          %s294 = sand.u32 %s126, 1
          %s295 = scalar_lea.sflag [#allocation4], %s294
          %s296 = sand.u32 %s126, 1
          %s297 = smul.addr %s296, 8
          %s298 = scalar_lea.vmem [#allocation8], %s297
          %299 = dma.done %s295, 128
        $region56: #{tpu_custom_call.1} parent=51 // pred_fallthru
          _
      $region52: #{tpu_custom_call.1} parent=5 // pred_fallthru
        _
    $region6: #{tpu_custom_call.1} parent=1 // loop_footer
      %s20 = sadd.s32 1, %s16
    $region7: #{tpu_custom_call.1} parent=1 // loop_footer_branch
      %15 = sbr.rel target = $region3
    $region8: #{tpu_custom_call.1} parent=1 // loop_exit
      _
    %300 = vsyncpa [#allocation3], 1
    %s301 = scalar_lea.sflag [#allocation3], 1
    %302 = vsyncpa %s301, 1
    %303 = vsyncpa [#allocation6], 1
    %s304 = scalar_lea.sflag [#allocation6], 1
    %305 = vsyncpa %s304, 1
    %306 = vsyncpa [#allocation4], 1
    %s307 = scalar_lea.sflag [#allocation4], 1
    %308 = vsyncpa %s307, 1

</llo_original>
